<compile_context>
chip_gen: v5e
topology: v5e:2x2
jax: 0.10.0
libtpu: 0.0.40
codegen_flags: <defaults>
</compile_context>

<pallas_src>
import functools
import math

import jax
import jax.numpy as jnp
from jax import lax
from jax.experimental import pallas as pl
from jax.experimental.pallas import tpu as pltpu


def padding_same(input, kernel, stride=1, dilation=1):
    """Same formula as the PyTorch module (no print)."""
    return int(0.5 * (stride * (input - 1) - input + kernel
                      + (dilation - 1) * (kernel - 1)))


def _round_up(x, m):
    return ((x + m - 1) // m) * m


def _pick_batch_group(N, Lp, target_lanes=2048):
    """Largest batch group NB (divisor of N) with NB*Lp <= target_lanes while
    keeping n_groups = N // NB >= 2 (shards the parallel grid axis across
    v7x's two TensorCores).  Falls back to NB=1 when N==1 or Lp is huge."""
    if N <= 1:
        return 1
    best = 1
    for nb in range(1, N // 2 + 1):
        if N % nb == 0 and nb * Lp <= target_lanes:
            best = nb
    return best


def _preconv_conv1d_kernel(x_ref, mask_ref, w1_ref, shift_ref, w2_ref, o_ref,
                           *, C_in, K, dilation, W_out):
    # x_ref:     (C_in, W_in)       lane-flattened, per-batch zero-padded input
    # mask_ref:  (1, W_in)          1 at real samples, 0 at pad margins / tail
    # w1_ref:    (C_mid, C_in)      1x1-conv weight with BN scale folded in (f32)
    # shift_ref: (C_mid, 1)         fused BN shift = beta - mean * scale (f32)
    # w2_ref:    (K, C_out_p, C_mid) main-conv weight, tap-major, bf16
    # o_ref:     (C_out_p, W_out)   dense (stride-1) correlation output, f32
    x = x_ref[...]
    w1 = w1_ref[...]

    # --- 1x1 conv (+ fused BN shift) + ReLU, then exact-zero the pad lanes ---
    if C_in <= 8:
        # Tiny contraction: VPU broadcast multiply-adds; keeps the MXU free.
        mid = w1[:, 0:1] * x[0:1, :]
        for c in range(1, C_in):
            mid = mid + w1[:, c:c + 1] * x[c:c + 1, :]
    else:
        mid = jnp.dot(w1, x, preferred_element_type=jnp.float32)
    mid = jnp.maximum(mid + shift_ref[...], 0.0) * mask_ref[...]   # (C_mid, W_in)

    # --- main conv: K matmuls over lane-shifted slices, f32 accumulator ---
    acc = jnp.zeros(o_ref.shape, jnp.float32)
    for k in range(K):                                  # K is a static python int
        s = k * dilation
        tap = mid[:, s:s + W_out].astype(jnp.bfloat16)  # (C_mid, W_out)
        acc = acc + jnp.dot(w2_ref[k], tap, preferred_element_type=jnp.float32)
    o_ref[...] = acc.astype(o_ref.dtype)


def preconv_conv1d(x, w1, bn_gamma, bn_beta, bn_mean, bn_var, w2,
                   *, conv_stride=1, dilation=1, pad=0, eps=1e-5):
    """x: (N, C_in, L) f32; w1: (C_mid, C_in); w2: (C_out, C_mid, K)."""
    N, C_in, L = x.shape
    C_out, C_mid, K = w2.shape
    Lp = L + 2 * pad
    L_out = (L + 2 * pad - dilation * (K - 1) - 1) // conv_stride + 1
    assert L_out >= 1

    # Fuse BatchNorm (inference mode): fold the scale into w1, keep the shift.
    scale = bn_gamma / jnp.sqrt(bn_var + eps)
    w1_scaled = (scale[:, None] * w1).astype(jnp.float32)             # (C_mid, C_in)
    shift = (bn_beta - bn_mean * scale).reshape(C_mid, 1).astype(jnp.float32)

    # Main-conv weight: tap-major (K, C_out_p, C_mid), bf16 for the MXU.
    # C_out padded to a multiple of 8 sublanes -> unmasked output stores.
    C_out_p = max(8, _round_up(C_out, 8))
    w2_t = jnp.transpose(w2, (2, 0, 1))                                # (K, C_out, C_mid)
    w2_t = jnp.pad(w2_t, ((0, 0), (0, C_out_p - C_out), (0, 0))).astype(jnp.bfloat16)

    # Batch grouping / lane-dense geometry.
    NB = _pick_batch_group(N, Lp)
    G = N // NB
    W_out = _round_up(NB * Lp, 128)                       # output lane width (128-dense)
    W_in = _round_up(W_out + (K - 1) * dilation, 128)     # + halo for tap shifts

    # Per-group, lane-flattened, zero-padded input slab: (C_in, G * W_in).
    xp = jnp.pad(x.astype(jnp.float32), ((0, 0), (0, 0), (pad, pad)))  # (N, C_in, Lp)
    xg = xp.reshape(G, NB, C_in, Lp).transpose(0, 2, 1, 3).reshape(G, C_in, NB * Lp)
    xg = jnp.pad(xg, ((0, 0), (0, 0), (0, W_in - NB * Lp)))            # (G, C_in, W_in)
    x_flat = xg.transpose(1, 0, 2).reshape(C_in, G * W_in)

    # Validity mask (identical for every group).
    mask = jnp.pad(jnp.ones((NB, L), jnp.float32), ((0, 0), (pad, pad)))
    mask = jnp.pad(mask.reshape(1, NB * Lp), ((0, 0), (0, W_in - NB * Lp)))

    kernel = functools.partial(_preconv_conv1d_kernel,
                               C_in=C_in, K=K, dilation=dilation, W_out=W_out)

    cost = pl.CostEstimate(
        flops=2 * G * W_in * C_in * C_mid + 2 * G * W_out * K * C_mid * C_out_p,
        transcendentals=0,
        bytes_accessed=4 * (C_in * G * W_in + G * W_in + C_mid * C_in + C_mid
                            + C_out_p * G * W_out) + 2 * K * C_out_p * C_mid)

    out_flat = pl.pallas_call(
        kernel,
        out_shape=jax.ShapeDtypeStruct((C_out_p, G * W_out), jnp.float32),
        grid_spec=pltpu.PrefetchScalarGridSpec(
            num_scalar_prefetch=0,
            grid=(G,),
            in_specs=[
                pl.BlockSpec((C_in, W_in), lambda g: (0, g)),
                pl.BlockSpec((1, W_in), lambda g: (0, 0)),
                pl.BlockSpec((C_mid, C_in), lambda g: (0, 0)),
                pl.BlockSpec((C_mid, 1), lambda g: (0, 0)),
                pl.BlockSpec((K, C_out_p, C_mid), lambda g: (0, 0, 0)),
            ],
            out_specs=pl.BlockSpec((C_out_p, W_out), lambda g: (0, g)),
        ),
        compiler_params=pltpu.CompilerParams(
            dimension_semantics=("parallel",),
            vmem_limit_bytes=32 * 1024 * 1024),
        cost_estimate=cost,
    )(x_flat, mask, w1_scaled, shift, w2_t)

    # (C_out_p, G*W_out) -> drop lane/sublane padding, apply stride -> (N, C_out, L_out)
    out = out_flat.reshape(C_out_p, G, W_out)[:, :, :NB * Lp].reshape(C_out_p, N, Lp)
    out = out[:C_out, :, :(L_out - 1) * conv_stride + 1:conv_stride]
    return jnp.transpose(out, (1, 0, 2))


def _reference(x, w1, bn_gamma, bn_beta, bn_mean, bn_var, w2,
               *, conv_stride, dilation, pad, eps=1e-5):
    """Pure-JAX reference mirroring the PyTorch module (BN in eval mode)."""
    dn = ('NCH', 'OIH', 'NCH')
    pre = lax.conv_general_dilated(x, w1[:, :, None], window_strides=(1,),
                                   padding=[(0, 0)], dimension_numbers=dn)
    scale = bn_gamma / jnp.sqrt(bn_var + eps)
    shift = bn_beta - bn_mean * scale
    pre = pre * scale[None, :, None] + shift[None, :, None]
    pre = jnp.maximum(pre, 0.0)
    out = lax.conv_general_dilated(pre, w2, window_strides=(conv_stride,),
                                   padding=[(pad, pad)], rhs_dilation=(dilation,),
                                   dimension_numbers=dn)
    return out


if __name__ == "__main__":
    # Module hyper-params (small, consistent with PreconvConv1d defaults).
    input_size = 16       # L
    in_channels = 3
    conv_kernel = 5
    conv_stride = 1
    dilation_factor = 1
    out_channels = 4
    n_growth_rate = 2
    pre_conv_out_channels = int(n_growth_rate * out_channels)   # C_mid = 8
    pad = padding_same(input_size, conv_kernel, conv_stride, dilation_factor)

    N = 2
    key = jax.random.PRNGKey(0)
    kx, k1, k2, kg, kb = jax.random.split(key, 5)

    x = jax.random.normal(kx, (N, in_channels, input_size), jnp.float32)

    # Deterministic synthetic weights / BN stats.
    w1 = jax.random.normal(k1, (pre_conv_out_channels, in_channels), jnp.float32)
    w1 = w1 * (1.0 / math.sqrt(in_channels))
    w2 = jax.random.normal(k2, (out_channels, pre_conv_out_channels, conv_kernel),
                           jnp.float32)
    w2 = w2 * (1.0 / math.sqrt(pre_conv_out_channels * conv_kernel))
    bn_gamma = 1.0 + 0.1 * jax.random.normal(kg, (pre_conv_out_channels,), jnp.float32)
    bn_beta = 0.1 * jax.random.normal(kb, (pre_conv_out_channels,), jnp.float32)
    bn_mean = jnp.linspace(-0.2, 0.2, pre_conv_out_channels, dtype=jnp.float32)
    bn_var = jnp.linspace(0.5, 1.5, pre_conv_out_channels, dtype=jnp.float32)

    out = preconv_conv1d(x, w1, bn_gamma, bn_beta, bn_mean, bn_var, w2,
                         conv_stride=conv_stride, dilation=dilation_factor, pad=pad)
    out = jax.block_until_ready(out)

    ref = _reference(x, w1, bn_gamma, bn_beta, bn_mean, bn_var, w2,
                     conv_stride=conv_stride, dilation=dilation_factor, pad=pad)
    assert out.shape == ref.shape, (out.shape, ref.shape)
    # bf16 MXU operands in the main conv (per perf review) -> relaxed tolerance.
    assert jnp.allclose(out, ref, atol=5e-2, rtol=5e-2), float(jnp.abs(out - ref).max())

    print("KERNEL_OK")
</pallas_src>

<mosaic_0001>
module attributes {stable_mosaic.version = 11 : i64} {
  func.func @_preconv_conv1d_kernel(%arg0: i32, %arg1: memref<3x256xf32, #tpu.memory_space<vmem>>, %arg2: memref<1x256xf32, #tpu.memory_space<vmem>>, %arg3: memref<8x3xf32, #tpu.memory_space<vmem>>, %arg4: memref<8x1xf32, #tpu.memory_space<vmem>>, %arg5: memref<5x8x8xbf16, #tpu.memory_space<vmem>>, %arg6: memref<8x128xf32, #tpu.memory_space<vmem>>) attributes {dimension_semantics = [#tpu.dimension_semantics<parallel>], iteration_bounds = array<i64: 2>, scalar_prefetch = 0 : i64, scratch_operands = 0 : i64, tpu.core_type = #tpu.core_type<tc>, window_params = [{transform_indices = @transform_0, window_bounds = array<i64: 3, 256>}, {pipeline_mode = #tpu.pipeline_mode<synchronous>, transform_indices = @transform_1, window_bounds = array<i64: 1, 256>}, {pipeline_mode = #tpu.pipeline_mode<synchronous>, transform_indices = @transform_2, window_bounds = array<i64: 8, 3>}, {pipeline_mode = #tpu.pipeline_mode<synchronous>, transform_indices = @transform_3, window_bounds = array<i64: 8, 1>}, {pipeline_mode = #tpu.pipeline_mode<synchronous>, transform_indices = @transform_4, window_bounds = array<i64: 5, 8, 8>}, {transform_indices = @transform_5, window_bounds = array<i64: 8, 128>}]} {
    %c0 = arith.constant 0 : index
    %c0_0 = arith.constant 0 : index
    %0 = vector.load %arg1[%c0, %c0_0] : memref<3x256xf32, #tpu.memory_space<vmem>>, vector<3x256xf32>
    %c0_1 = arith.constant 0 : index
    %c0_2 = arith.constant 0 : index
    %1 = vector.load %arg3[%c0_1, %c0_2] : memref<8x3xf32, #tpu.memory_space<vmem>>, vector<8x3xf32>
    %2 = vector.extract_strided_slice %1 {offsets = [0, 0], sizes = [8, 1], strides = [1, 1]} : vector<8x3xf32> to vector<8x1xf32>
    %3 = vector.extract_strided_slice %0 {offsets = [0, 0], sizes = [1, 256], strides = [1, 1]} : vector<3x256xf32> to vector<1x256xf32>
    %4 = vector.broadcast %2 : vector<8x1xf32> to vector<8x256xf32>
    %5 = vector.broadcast %3 : vector<1x256xf32> to vector<8x256xf32>
    %6 = arith.mulf %4, %5 : vector<8x256xf32>
    %7 = vector.extract_strided_slice %1 {offsets = [0, 1], sizes = [8, 1], strides = [1, 1]} : vector<8x3xf32> to vector<8x1xf32>
    %8 = vector.extract_strided_slice %0 {offsets = [1, 0], sizes = [1, 256], strides = [1, 1]} : vector<3x256xf32> to vector<1x256xf32>
    %9 = vector.broadcast %7 : vector<8x1xf32> to vector<8x256xf32>
    %10 = vector.broadcast %8 : vector<1x256xf32> to vector<8x256xf32>
    %11 = arith.mulf %9, %10 : vector<8x256xf32>
    %12 = arith.addf %6, %11 : vector<8x256xf32>
    %13 = vector.extract_strided_slice %1 {offsets = [0, 2], sizes = [8, 1], strides = [1, 1]} : vector<8x3xf32> to vector<8x1xf32>
    %14 = vector.extract_strided_slice %0 {offsets = [2, 0], sizes = [1, 256], strides = [1, 1]} : vector<3x256xf32> to vector<1x256xf32>
    %15 = vector.broadcast %13 : vector<8x1xf32> to vector<8x256xf32>
    %16 = vector.broadcast %14 : vector<1x256xf32> to vector<8x256xf32>
    %17 = arith.mulf %15, %16 : vector<8x256xf32>
    %18 = arith.addf %12, %17 : vector<8x256xf32>
    %c0_3 = arith.constant 0 : index
    %c0_4 = arith.constant 0 : index
    %19 = vector.load %arg4[%c0_3, %c0_4] : memref<8x1xf32, #tpu.memory_space<vmem>>, vector<8x1xf32>
    %20 = vector.broadcast %19 : vector<8x1xf32> to vector<8x256xf32>
    %21 = arith.addf %18, %20 : vector<8x256xf32>
    %cst = arith.constant 0.000000e+00 : f32
    %22 = vector.broadcast %cst : f32 to vector<8x256xf32>
    %23 = arith.maximumf %21, %22 : vector<8x256xf32>
    %c0_5 = arith.constant 0 : index
    %c0_6 = arith.constant 0 : index
    %24 = vector.load %arg2[%c0_5, %c0_6] : memref<1x256xf32, #tpu.memory_space<vmem>>, vector<1x256xf32>
    %25 = vector.broadcast %24 : vector<1x256xf32> to vector<8x256xf32>
    %26 = arith.mulf %23, %25 : vector<8x256xf32>
    %cst_7 = arith.constant 0.000000e+00 : f32
    %27 = vector.broadcast %cst_7 : f32 to vector<8x128xf32>
    %28 = vector.extract_strided_slice %26 {offsets = [0, 0], sizes = [8, 128], strides = [1, 1]} : vector<8x256xf32> to vector<8x128xf32>
    %29 = arith.truncf %28 : vector<8x128xf32> to vector<8x128xbf16>
    %c0_8 = arith.constant 0 : index
    %c0_9 = arith.constant 0 : index
    %c0_10 = arith.constant 0 : index
    %30 = vector.load %arg5[%c0_8, %c0_9, %c0_10] : memref<5x8x8xbf16, #tpu.memory_space<vmem>>, vector<1x8x8xbf16>
    %31 = vector.shape_cast %30 : vector<1x8x8xbf16> to vector<8x8xbf16>
    %cst_11 = arith.constant dense<0.000000e+00> : vector<8x128xf32>
    %32 = tpu.matmul %31, %29, %cst_11 {dimension_numbers = #tpu.dot_dimension_numbers<[1], [0], [0], [1], [0, 0, 1, 1], [], []>} : vector<8x8xbf16>, vector<8x128xbf16>, vector<8x128xf32> -> vector<8x128xf32>
    %33 = arith.addf %27, %32 : vector<8x128xf32>
    %34 = vector.extract_strided_slice %26 {offsets = [0, 1], sizes = [8, 128], strides = [1, 1]} : vector<8x256xf32> to vector<8x128xf32>
    %35 = arith.truncf %34 : vector<8x128xf32> to vector<8x128xbf16>
    %c1 = arith.constant 1 : index
    %c0_12 = arith.constant 0 : index
    %c0_13 = arith.constant 0 : index
    %36 = vector.load %arg5[%c1, %c0_12, %c0_13] : memref<5x8x8xbf16, #tpu.memory_space<vmem>>, vector<1x8x8xbf16>
    %37 = vector.shape_cast %36 : vector<1x8x8xbf16> to vector<8x8xbf16>
    %cst_14 = arith.constant dense<0.000000e+00> : vector<8x128xf32>
    %38 = tpu.matmul %37, %35, %cst_14 {dimension_numbers = #tpu.dot_dimension_numbers<[1], [0], [0], [1], [0, 0, 1, 1], [], []>} : vector<8x8xbf16>, vector<8x128xbf16>, vector<8x128xf32> -> vector<8x128xf32>
    %39 = arith.addf %33, %38 : vector<8x128xf32>
    %40 = vector.extract_strided_slice %26 {offsets = [0, 2], sizes = [8, 128], strides = [1, 1]} : vector<8x256xf32> to vector<8x128xf32>
    %41 = arith.truncf %40 : vector<8x128xf32> to vector<8x128xbf16>
    %c2 = arith.constant 2 : index
    %c0_15 = arith.constant 0 : index
    %c0_16 = arith.constant 0 : index
    %42 = vector.load %arg5[%c2, %c0_15, %c0_16] : memref<5x8x8xbf16, #tpu.memory_space<vmem>>, vector<1x8x8xbf16>
    %43 = vector.shape_cast %42 : vector<1x8x8xbf16> to vector<8x8xbf16>
    %cst_17 = arith.constant dense<0.000000e+00> : vector<8x128xf32>
    %44 = tpu.matmul %43, %41, %cst_17 {dimension_numbers = #tpu.dot_dimension_numbers<[1], [0], [0], [1], [0, 0, 1, 1], [], []>} : vector<8x8xbf16>, vector<8x128xbf16>, vector<8x128xf32> -> vector<8x128xf32>
    %45 = arith.addf %39, %44 : vector<8x128xf32>
    %46 = vector.extract_strided_slice %26 {offsets = [0, 3], sizes = [8, 128], strides = [1, 1]} : vector<8x256xf32> to vector<8x128xf32>
    %47 = arith.truncf %46 : vector<8x128xf32> to vector<8x128xbf16>
    %c3 = arith.constant 3 : index
    %c0_18 = arith.constant 0 : index
    %c0_19 = arith.constant 0 : index
    %48 = vector.load %arg5[%c3, %c0_18, %c0_19] : memref<5x8x8xbf16, #tpu.memory_space<vmem>>, vector<1x8x8xbf16>
    %49 = vector.shape_cast %48 : vector<1x8x8xbf16> to vector<8x8xbf16>
    %cst_20 = arith.constant dense<0.000000e+00> : vector<8x128xf32>
    %50 = tpu.matmul %49, %47, %cst_20 {dimension_numbers = #tpu.dot_dimension_numbers<[1], [0], [0], [1], [0, 0, 1, 1], [], []>} : vector<8x8xbf16>, vector<8x128xbf16>, vector<8x128xf32> -> vector<8x128xf32>
    %51 = arith.addf %45, %50 : vector<8x128xf32>
    %52 = vector.extract_strided_slice %26 {offsets = [0, 4], sizes = [8, 128], strides = [1, 1]} : vector<8x256xf32> to vector<8x128xf32>
    %53 = arith.truncf %52 : vector<8x128xf32> to vector<8x128xbf16>
    %c4 = arith.constant 4 : index
    %c0_21 = arith.constant 0 : index
    %c0_22 = arith.constant 0 : index
    %54 = vector.load %arg5[%c4, %c0_21, %c0_22] : memref<5x8x8xbf16, #tpu.memory_space<vmem>>, vector<1x8x8xbf16>
    %55 = vector.shape_cast %54 : vector<1x8x8xbf16> to vector<8x8xbf16>
    %cst_23 = arith.constant dense<0.000000e+00> : vector<8x128xf32>
    %56 = tpu.matmul %55, %53, %cst_23 {dimension_numbers = #tpu.dot_dimension_numbers<[1], [0], [0], [1], [0, 0, 1, 1], [], []>} : vector<8x8xbf16>, vector<8x128xbf16>, vector<8x128xf32> -> vector<8x128xf32>
    %57 = arith.addf %51, %56 : vector<8x128xf32>
    %c0_24 = arith.constant 0 : index
    %c0_25 = arith.constant 0 : index
    %58 = vector.load %arg6[%c0_24, %c0_25] : memref<8x128xf32, #tpu.memory_space<vmem>>, vector<8x128xf32>
    tpu.vector_store %arg6[%c0_24, %c0_25], %57 {strides = array<i32>} : memref<8x128xf32, #tpu.memory_space<vmem>>, vector<8x128xf32>,
    return
  }
  func.func @transform_0(%arg0: i32) -> (i32, i32) {
    %c0_i32 = arith.constant 0 : i32
    %c0_i32_0 = arith.constant 0 : i32
    return %c0_i32, %arg0 : i32, i32
  }
  func.func @transform_1(%arg0: i32) -> (i32, i32) {
    %c0_i32 = arith.constant 0 : i32
    %c0_i32_0 = arith.constant 0 : i32
    %c0_i32_1 = arith.constant 0 : i32
    return %c0_i32, %c0_i32_0 : i32, i32
  }
  func.func @transform_2(%arg0: i32) -> (i32, i32) {
    %c0_i32 = arith.constant 0 : i32
    %c0_i32_0 = arith.constant 0 : i32
    %c0_i32_1 = arith.constant 0 : i32
    return %c0_i32, %c0_i32_0 : i32, i32
  }
  func.func @transform_3(%arg0: i32) -> (i32, i32) {
    %c0_i32 = arith.constant 0 : i32
    %c0_i32_0 = arith.constant 0 : i32
    %c0_i32_1 = arith.constant 0 : i32
    return %c0_i32, %c0_i32_0 : i32, i32
  }
  func.func @transform_4(%arg0: i32) -> (i32, i32, i32) {
    %c0_i32 = arith.constant 0 : i32
    %c0_i32_0 = arith.constant 0 : i32
    %c0_i32_1 = arith.constant 0 : i32
    %c0_i32_2 = arith.constant 0 : i32
    return %c0_i32, %c0_i32_0, %c0_i32_1 : i32, i32, i32
  }
  func.func @transform_5(%arg0: i32) -> (i32, i32) {
    %c0_i32 = arith.constant 0 : i32
    %c0_i32_0 = arith.constant 0 : i32
    return %c0_i32, %arg0 : i32, i32
  }
}

</mosaic_0001>

<llo_original>
// kernel: tpu_custom_call.1
$region0: #{tpu_custom_call.1}
  #allocation0 [shape = 'u32[]', space=smem, size = 0x4, offset = 0x4, fixed_abs, tag = 'smem constant byte address 0x4 - core index']
  #allocation1 [shape = 'u32[72,128]{1,0:T(1,128)}', space=vmem, size = 0x9000, scoped, tag = 'internal scratch']
  %s0 = inlined_call_operand.hbm [shape: f32[3,512], index: 0, kind: input, shape index: {}]
  %s1 = inlined_call_operand.vmem [shape: f32[1,256], index: 1, kind: input, shape index: {}]
  %s2 = inlined_call_operand.vmem [shape: f32[8,3], index: 2, kind: input, shape index: {}]
  %s3 = inlined_call_operand.vmem [shape: f32[8,1], index: 3, kind: input, shape index: {}]
  %s4 = inlined_call_operand.vmem [shape: bf16[5,8,8], index: 4, kind: input, shape index: {}]
  %s5 = inlined_call_operand.hbm [shape: f32[8,256], index: 5, kind: output, shape index: {}]
  %s6 = sld [smem:[#allocation0]]
  $region57: #{tpu_custom_call.1} parent=0
    _
  %s8 = ssub.s32 1, %s6
  %s9 = scalar_select 0, %s8, %s6
  $region1: #{tpu_custom_call.1} parent=0
    #allocation2 [shape = 'u8[8192]{0}', space=vmem, size = 0x2000, scoped, tag = 'input window, operand 0']
    #allocation3 [shape = 's32[2]{0}', space=sflag, size = 0x8, scoped, tag = 'scoped memory for tpu_custom_call.1']
    #allocation4 [shape = 's32[2]{0}', space=sflag, size = 0x8, scoped, tag = 'scoped memory for tpu_custom_call.1']
    #allocation5 [shape = 'u8[8192]{0}', space=vmem, size = 0x2000, scoped, tag = 'output window, operand 0']
    %10 = vsyncpa [#allocation3], 0
    %s11 = scalar_lea.sflag [#allocation3], 1
    %12 = vsyncpa %s11, 0
    %13 = vsyncpa [#allocation4], 0
    %s14 = scalar_lea.sflag [#allocation4], 1
    %15 = vsyncpa %s14, 0
    loop: start=0, step=1, limit=4
    $region2: #{tpu_custom_call.1} parent=1 // loop_pre_header
      _
    $region3: #{tpu_custom_call.1} parent=1 // loop_header
      %s17 = sphi 0, %s21
      %p18 = scmp.ge.s32.totalorder %s17, 4
      %s27 = sphi 0, %s29
      %s30 = sphi 0, %s27
      %s31 = sphi 0, %s30
      %s47 = sphi 0, %s31
      %s51 = sphi 0, %s51
      %s53 = sphi 0, %s51
      %s54 = sphi 0, %s53
      %s68 = sphi 0, %s54
      %s72 = sphi 0, %s72
      %s74 = sphi 0, %s72
      %s75 = sphi 0, %s74
      %s89 = sphi 0, %s75
      %s93 = sphi 0, %s93
      %s95 = sphi 0, %s93
      %s96 = sphi 0, %s95
      %s110 = sphi 0, %s96
      %s114 = sphi 0, %s114
      %s116 = sphi 0, %s114
      %s117 = sphi 0, %s116
      %s131 = sphi 0, %s117
      %s137 = sphi 0, %s139
      %s140 = sphi 0, %s137
      %s141 = sphi 0, %s140
      %s157 = sphi 0, %s141
    $region4: #{tpu_custom_call.1} parent=1 // loop_header_branch
      %20 = sbr.rel (%p18) target = $region8
    $region5: #{tpu_custom_call.1} parent=1 // loop_body
      %s22 = ssub.s32 %s17, 1
      %s23 = ssub.s32 %s17, 2
      %s24 = sadd.s32 %s17, 1
      %s25 = ssub.s32 %s17, %s24
      %p26 = scmp.eq.s32.totalorder %s25, 0
      %s28 = sadd.s32 %s27, 1
      %s29 = scalar_select %p26, %s27, %s28
      %p32 = pneg %p26
      %p33 = scmp.eq.s32.totalorder %s17, 1
      %p34 = por %p32, %p33
      %p35 = scmp.ne.s32.totalorder %s27, %s30
      %p36 = scmp.eq.s32.totalorder %s17, 0
      %p37 = por %p35, %p36
      %p38 = scmp.ne.s32.totalorder %s27, %s30
      %p39 = scmp.eq.s32.totalorder %s22, 1
      %p40 = por %p38, %p39
      %p41 = scmp.ne.s32.totalorder %s30, %s31
      %p42 = scmp.eq.s32.totalorder %s22, 0
      %p43 = por %p41, %p42
      %p44 = scmp.ne.s32.totalorder %s30, %s31
      %p45 = scmp.eq.s32.totalorder %s23, 1
      %p46 = por %p44, %p45
      %p48 = scmp.ne.s32.totalorder %s31, %s47
      %p49 = scmp.eq.s32.totalorder %s23, 0
      %p50 = por %p48, %p49
      %s52 = sadd.s32 %s51, 1
      %p55 = scmp.eq.s32.totalorder %s17, 1
      %p56 = scmp.ne.s32.totalorder %s51, %s53
      %p57 = scmp.eq.s32.totalorder %s17, 0
      %p58 = por %p56, %p57
      %p59 = scmp.ne.s32.totalorder %s51, %s53
      %p60 = scmp.eq.s32.totalorder %s22, 1
      %p61 = por %p59, %p60
      %p62 = scmp.ne.s32.totalorder %s53, %s54
      %p63 = scmp.eq.s32.totalorder %s22, 0
      %p64 = por %p62, %p63
      %p65 = scmp.ne.s32.totalorder %s53, %s54
      %p66 = scmp.eq.s32.totalorder %s23, 1
      %p67 = por %p65, %p66
      %p69 = scmp.ne.s32.totalorder %s54, %s68
      %p70 = scmp.eq.s32.totalorder %s23, 0
      %p71 = por %p69, %p70
      %s73 = sadd.s32 %s72, 1
      %p76 = scmp.eq.s32.totalorder %s17, 1
      %p77 = scmp.ne.s32.totalorder %s72, %s74
      %p78 = scmp.eq.s32.totalorder %s17, 0
      %p79 = por %p77, %p78
      %p80 = scmp.ne.s32.totalorder %s72, %s74
      %p81 = scmp.eq.s32.totalorder %s22, 1
      %p82 = por %p80, %p81
      %p83 = scmp.ne.s32.totalorder %s74, %s75
      %p84 = scmp.eq.s32.totalorder %s22, 0
      %p85 = por %p83, %p84
      %p86 = scmp.ne.s32.totalorder %s74, %s75
      %p87 = scmp.eq.s32.totalorder %s23, 1
      %p88 = por %p86, %p87
      %p90 = scmp.ne.s32.totalorder %s75, %s89
      %p91 = scmp.eq.s32.totalorder %s23, 0
      %p92 = por %p90, %p91
      %s94 = sadd.s32 %s93, 1
      %p97 = scmp.eq.s32.totalorder %s17, 1
      %p98 = scmp.ne.s32.totalorder %s93, %s95
      %p99 = scmp.eq.s32.totalorder %s17, 0
      %p100 = por %p98, %p99
      %p101 = scmp.ne.s32.totalorder %s93, %s95
      %p102 = scmp.eq.s32.totalorder %s22, 1
      %p103 = por %p101, %p102
      %p104 = scmp.ne.s32.totalorder %s95, %s96
      %p105 = scmp.eq.s32.totalorder %s22, 0
      %p106 = por %p104, %p105
      %p107 = scmp.ne.s32.totalorder %s95, %s96
      %p108 = scmp.eq.s32.totalorder %s23, 1
      %p109 = por %p107, %p108
      %p111 = scmp.ne.s32.totalorder %s96, %s110
      %p112 = scmp.eq.s32.totalorder %s23, 0
      %p113 = por %p111, %p112
      %s115 = sadd.s32 %s114, 1
      %p118 = scmp.eq.s32.totalorder %s17, 1
      %p119 = scmp.ne.s32.totalorder %s114, %s116
      %p120 = scmp.eq.s32.totalorder %s17, 0
      %p121 = por %p119, %p120
      %p122 = scmp.ne.s32.totalorder %s114, %s116
      %p123 = scmp.eq.s32.totalorder %s22, 1
      %p124 = por %p122, %p123
      %p125 = scmp.ne.s32.totalorder %s116, %s117
      %p126 = scmp.eq.s32.totalorder %s22, 0
      %p127 = por %p125, %p126
      %p128 = scmp.ne.s32.totalorder %s116, %s117
      %p129 = scmp.eq.s32.totalorder %s23, 1
      %p130 = por %p128, %p129
      %p132 = scmp.ne.s32.totalorder %s117, %s131
      %p133 = scmp.eq.s32.totalorder %s23, 0
      %p134 = por %p132, %p133
      %s135 = ssub.s32 %s17, %s24
      %p136 = scmp.eq.s32.totalorder %s135, 0
      %s138 = sadd.s32 %s137, 1
      %s139 = scalar_select %p136, %s137, %s138
      %p142 = pneg %p136
      %p143 = scmp.eq.s32.totalorder %s17, 1
      %p144 = por %p142, %p143
      %p145 = scmp.ne.s32.totalorder %s137, %s140
      %p146 = scmp.eq.s32.totalorder %s17, 0
      %p147 = por %p145, %p146
      %p148 = scmp.ne.s32.totalorder %s137, %s140
      %p149 = scmp.eq.s32.totalorder %s22, 1
      %p150 = por %p148, %p149
      %p151 = scmp.ne.s32.totalorder %s140, %s141
      %p152 = scmp.eq.s32.totalorder %s22, 0
      %p153 = por %p151, %p152
      %p154 = scmp.ne.s32.totalorder %s140, %s141
      %p155 = scmp.eq.s32.totalorder %s23, 1
      %p156 = por %p154, %p155
      %p158 = scmp.ne.s32.totalorder %s141, %s157
      %p159 = scmp.eq.s32.totalorder %s23, 0
      %p160 = por %p158, %p159
      %p161 = scmp.le.s32.totalorder 1, %s17
      %p162 = scmp.lt.s32.totalorder %s17, 3
      %p163 = pnand %p161, %p162
      %p164 = pneg %p163
      // Predicated region
      $region9: #{tpu_custom_call.1} parent=5 // pred_check
        _
      $region10: #{tpu_custom_call.1} parent=5 // pred_check_branch
        %166 = sbr.rel (%p163) target = $region12
      $region11: #{tpu_custom_call.1} parent=5 // pred_region
        %s167 = ssub.s32 %s17, 1
        // Predicated region
        $region13: #{tpu_custom_call.1} parent=11 // pred_check
          %p168 = pneg %p64
        $region14: #{tpu_custom_call.1} parent=11 // pred_check_branch
          %170 = sbr.rel (%p168) target = $region16
        $region15: #{tpu_custom_call.1} parent=11 // pred_region
          _
        $region16: #{tpu_custom_call.1} parent=11 // pred_fallthru
          _
        // Predicated region
        $region17: #{tpu_custom_call.1} parent=11 // pred_check
          %p171 = pneg %p85
        $region18: #{tpu_custom_call.1} parent=11 // pred_check_branch
          %173 = sbr.rel (%p171) target = $region20
        $region19: #{tpu_custom_call.1} parent=11 // pred_region
          _
        $region20: #{tpu_custom_call.1} parent=11 // pred_fallthru
          _
        // Predicated region
        $region21: #{tpu_custom_call.1} parent=11 // pred_check
          %p174 = pneg %p106
        $region22: #{tpu_custom_call.1} parent=11 // pred_check_branch
          %176 = sbr.rel (%p174) target = $region24
        $region23: #{tpu_custom_call.1} parent=11 // pred_region
          _
        $region24: #{tpu_custom_call.1} parent=11 // pred_fallthru
          _
        // Predicated region
        $region25: #{tpu_custom_call.1} parent=11 // pred_check
          %p177 = pneg %p127
        $region26: #{tpu_custom_call.1} parent=11 // pred_check_branch
          %179 = sbr.rel (%p177) target = $region28
        $region27: #{tpu_custom_call.1} parent=11 // pred_region
          _
        $region28: #{tpu_custom_call.1} parent=11 // pred_fallthru
          _
      $region12: #{tpu_custom_call.1} parent=5 // pred_fallthru
        _
      %p180 = scmp.lt.s32.totalorder %s17, 2
      // Predicated region
      $region29: #{tpu_custom_call.1} parent=5 // pred_check
        %p181 = pneg %p180
      $region30: #{tpu_custom_call.1} parent=5 // pred_check_branch
        %183 = sbr.rel (%p181) target = $region32
      $region31: #{tpu_custom_call.1} parent=5 // pred_region
        // Predicated region
        $region33: #{tpu_custom_call.1} parent=31 // pred_check
          %p184 = pneg %p37
        $region34: #{tpu_custom_call.1} parent=31 // pred_check_branch
          %186 = sbr.rel (%p184) target = $region36
        $region35: #{tpu_custom_call.1} parent=31 // pred_region
          %s187 = sand.u32 %s27, 1
          %s188 = scalar_lea.sflag [#allocation3], %s187
          %s189 = sand.u32 %s27, 1
          %s190 = smul.addr %s189, 8
          %s191 = scalar_lea.vmem [#allocation2], %s190
          %s192 = smul.u32 2, %s17
          %194 = vsyncadd %s188, 0
          %s195 = smul.addr %s192, 4
          %s196 = scalar_lea.hbm %s0, %s195
          %s198 = sshll.u32 %s196, 4
          %s199 = int_to_ptr.hbm [resolvable:$true] %s198
          %s200 = sshll.u32 %s191, 4
          %s201 = int_to_ptr.vmem [resolvable:$true] %s200
          %203 = dma.hbm_to_vmem [thread:$0]  %s199, 128, %s201, %s188
        $region36: #{tpu_custom_call.1} parent=31 // pred_fallthru
          _
      $region32: #{tpu_custom_call.1} parent=5 // pred_fallthru
        _
      %p204 = scmp.le.s32.totalorder 1, %s17
      %p205 = scmp.lt.s32.totalorder %s17, 3
      %p206 = pnand %p204, %p205
      %p207 = pneg %p206
      // Predicated region
      $region37: #{tpu_custom_call.1} parent=5 // pred_check
        _
      $region38: #{tpu_custom_call.1} parent=5 // pred_check_branch
        %209 = sbr.rel (%p206) target = $region40
      $region39: #{tpu_custom_call.1} parent=5 // pred_region
        %s210 = ssub.s32 %s17, 1
        %s211 = sand.u32 %s30, 1
        %s212 = scalar_lea.sflag [#allocation3], %s211
        %s213 = sand.u32 %s30, 1
        %s214 = smul.addr %s213, 8
        %s215 = scalar_lea.vmem [#allocation2], %s214
        // Predicated region
        $region41: #{tpu_custom_call.1} parent=39 // pred_check
          %p216 = pneg %p43
        $region42: #{tpu_custom_call.1} parent=39 // pred_check_branch
          %218 = sbr.rel (%p216) target = $region44
        $region43: #{tpu_custom_call.1} parent=39 // pred_region
          %220 = dma.done %s212, 128
        $region44: #{tpu_custom_call.1} parent=39 // pred_fallthru
          _
        %s221 = sand.u32 %s30, 1
        %s222 = scalar_lea.sflag [#allocation3], %s221
        %s223 = sand.u32 %s30, 1
        %s224 = smul.addr %s223, 8
        %s225 = scalar_lea.vmem [#allocation2], %s224
        %p226 = pneg %p43
        %p227 = pneg %p40
        %p228 = pneg %p64
        %p229 = pneg %p61
        %p230 = pneg %p85
        %p231 = pneg %p82
        %p232 = pneg %p106
        %p233 = pneg %p103
        %p234 = pneg %p127
        %p235 = pneg %p124
        %p236 = pneg %p153
        %p237 = pneg %p150
        %s238 = sand.u32 %s140, 1
        %s239 = scalar_lea.sflag [#allocation4], %s238
        %s240 = sand.u32 %s140, 1
        %s241 = smul.addr %s240, 8
        %s242 = scalar_lea.vmem [#allocation5], %s241
        %s243 = smul.u32 2, %s22
        %v245 = vld [vmem:[%s215] sm:$0x77]
        %v246 = vld [vmem:[%s2] sm:$0xff]
        %248 = vset.pattern.permute.xlu0 0
        %249 = vperm.xlu0 %248, %v246
        %v250 = vpop.permute.xlu0 %249
        %v253 = vperm.slane %v245, 0
        %v254 = vperm.slane %v245, 4
        %v257 = vperm.slane %v253, 0
        %v258 = vperm.slane %v254, 0
        %v259 = vmul.f32 %v250, %v257
        %v260 = vmul.f32 %v250, %v258
        %261 = vset.pattern.permute.xlu0 1
        %262 = vperm.xlu0 %261, %v246
        %v263 = vpop.permute.xlu0 %262
        %v265 = vperm.slane %v245, 1
        %v266 = vperm.slane %v245, 5
        %v269 = vperm.slane %v265, 1
        %v270 = vperm.slane %v266, 1
        %v271 = vmul.f32 %v263, %v269
        %v272 = vmul.f32 %v263, %v270
        %v273 = vadd.f32 %v259, %v271
        %v274 = vadd.f32 %v260, %v272
        %275 = vset.pattern.permute.xlu0 2
        %276 = vperm.xlu0 %275, %v246
        %v277 = vpop.permute.xlu0 %276
        %v279 = vperm.slane %v245, 2
        %v280 = vperm.slane %v245, 6
        %v283 = vperm.slane %v279, 2
        %v284 = vperm.slane %v280, 2
        %v285 = vmul.f32 %v277, %v283
        %v286 = vmul.f32 %v277, %v284
        %v287 = vadd.f32 %v273, %v285
        %v288 = vadd.f32 %v274, %v286
        %v289 = vld [vmem:[%s3] sm:$0xff]
        %291 = vset.pattern.permute.xlu0 0
        %292 = vperm.xlu0 %291, %v289
        %v293 = vpop.permute.xlu0 %292
        %v295 = vadd.f32 %v287, %v293
        %v296 = vadd.f32 %v288, %v293
        %v297 = vmax.f32 %v295, 0.0
        %v298 = vmax.f32 %v296, 0.0
        %v299 = vld [vmem:[%s1] sm:$0x3]
        %v301 = vperm.slane %v299, 0
        %v302 = vperm.slane %v299, 1
        %v305 = vmul.f32 %v297, %v301
        %v306 = vmul.f32 %v298, %v302
        %v307 = vpack.c.bf16 %v305, %v305
        %v308 = vld [vmem:[%s4] sm:$0xf]
        %v309 = vpack.c.bf16 %v306, %v306
        %s310 = scalar_lea.vmem %s4, 4
        %v311 = vld [vmem:[%s310] sm:$0xf]
        %314 = vrot.lane.b32.xlu0 %v307, 127
        %v315 = vpop.permute.xlu0 %314
        %316 = vrot.lane.b32.xlu0 %v309, 127
        %v317 = vpop.permute.xlu0 %316
        %vm318 = vcmask 1039360
        %v319 = vsel %vm318, %v315, %v317
        %vm320 = vcmask 64512
        %v322 = vsel %vm320, %v311, 0
        %vm324 = vcmask 1043456
        %v326 = vsel %vm324, %v319, 0
        %328 = vmatpush.bf16.msra.mxu0 0
        %329 = vmatpush.bf16.msra.mxu0 0
        %330 = vmatpush.bf16.msra.mxu0 0
        %331 = vmatpush.bf16.msra.mxu0 0
        %332 = vmatpush.bf16.msra.mxu0 0
        %333 = vmatpush.bf16.msra.mxu0 0
        %334 = vmatpush.bf16.msra.mxu0 0
        %335 = vmatpush.bf16.msra.mxu0 %v326
        %336 = vmatmul.bf16.gmra.mxu0 %v322
        %v337 = vpop.f32.mrf.mxu0
        %v338 = vadd.f32 0.0, %v337
        %v339 = vpop.f32.mrf.mxu0
        %340 = vdwg.mxu0
        %v342 = vsel %vm320, %v308, 0
        %v345 = vsel %vm324, %v307, 0
        %347 = vmatpush.bf16.msra.mxu0 0
        %348 = vmatpush.bf16.msra.mxu0 0
        %349 = vmatpush.bf16.msra.mxu0 0
        %350 = vmatpush.bf16.msra.mxu0 0
        %351 = vmatpush.bf16.msra.mxu0 0
        %352 = vmatpush.bf16.msra.mxu0 0
        %353 = vmatpush.bf16.msra.mxu0 0
        %354 = vmatpush.bf16.msra.mxu0 %v345
        %355 = vmatmul.bf16.gmra.mxu0 %v342
        %v356 = vpop.f32.mrf.mxu0
        %v357 = vadd.f32 %v338, %v356
        %v358 = vpop.f32.mrf.mxu0
        %359 = vdwg.mxu0
        %s360 = scalar_lea.vmem %s4, 8
        %v361 = vld [vmem:[%s360] sm:$0xf]
        %362 = vrot.lane.b32.xlu0 %v307, 126
        %v363 = vpop.permute.xlu0 %362
        %364 = vrot.lane.b32.xlu0 %v309, 126
        %v365 = vpop.permute.xlu0 %364
        %vm366 = vcmask 1031168
        %v367 = vsel %vm366, %v363, %v365
        %v369 = vsel %vm320, %v361, 0
        %v372 = vsel %vm324, %v367, 0
        %374 = vmatpush.bf16.msra.mxu0 0
        %375 = vmatpush.bf16.msra.mxu0 0
        %376 = vmatpush.bf16.msra.mxu0 0
        %377 = vmatpush.bf16.msra.mxu0 0
        %378 = vmatpush.bf16.msra.mxu0 0
        %379 = vmatpush.bf16.msra.mxu0 0
        %380 = vmatpush.bf16.msra.mxu0 0
        %381 = vmatpush.bf16.msra.mxu0 %v372
        %382 = vmatmul.bf16.gmra.mxu0 %v369
        %v383 = vpop.f32.mrf.mxu0
        %v384 = vadd.f32 0.0, %v383
        %v385 = vpop.f32.mrf.mxu0
        %386 = vdwg.mxu0
        %v387 = vadd.f32 %v357, %v384
        %s388 = scalar_lea.vmem %s4, 12
        %v389 = vld [vmem:[%s388] sm:$0xf]
        %390 = vrot.lane.b32.xlu0 %v307, 125
        %v391 = vpop.permute.xlu0 %390
        %392 = vrot.lane.b32.xlu0 %v309, 125
        %v393 = vpop.permute.xlu0 %392
        %vm394 = vcmask 1022976
        %v395 = vsel %vm394, %v391, %v393
        %v397 = vsel %vm320, %v389, 0
        %v400 = vsel %vm324, %v395, 0
        %402 = vmatpush.bf16.msra.mxu0 0
        %403 = vmatpush.bf16.msra.mxu0 0
        %404 = vmatpush.bf16.msra.mxu0 0
        %405 = vmatpush.bf16.msra.mxu0 0
        %406 = vmatpush.bf16.msra.mxu0 0
        %407 = vmatpush.bf16.msra.mxu0 0
        %408 = vmatpush.bf16.msra.mxu0 0
        %409 = vmatpush.bf16.msra.mxu0 %v400
        %410 = vmatmul.bf16.gmra.mxu0 %v397
        %v411 = vpop.f32.mrf.mxu0
        %v412 = vadd.f32 0.0, %v411
        %v413 = vpop.f32.mrf.mxu0
        %414 = vdwg.mxu0
        %v415 = vadd.f32 %v387, %v412
        %s416 = scalar_lea.vmem %s4, 16
        %v417 = vld [vmem:[%s416] sm:$0xf]
        %418 = vrot.lane.b32.xlu0 %v307, 124
        %v419 = vpop.permute.xlu0 %418
        %420 = vrot.lane.b32.xlu0 %v309, 124
        %v421 = vpop.permute.xlu0 %420
        %vm422 = vcmask 1014784
        %v423 = vsel %vm422, %v419, %v421
        %v425 = vsel %vm320, %v417, 0
        %v428 = vsel %vm324, %v423, 0
        %430 = vmatpush.bf16.msra.mxu0 0
        %431 = vmatpush.bf16.msra.mxu0 0
        %432 = vmatpush.bf16.msra.mxu0 0
        %433 = vmatpush.bf16.msra.mxu0 0
        %434 = vmatpush.bf16.msra.mxu0 0
        %435 = vmatpush.bf16.msra.mxu0 0
        %436 = vmatpush.bf16.msra.mxu0 0
        %437 = vmatpush.bf16.msra.mxu0 %v428
        %438 = vmatmul.bf16.gmra.mxu0 %v425
        %v439 = vpop.f32.mrf.mxu0
        %v440 = vadd.f32 0.0, %v439
        %v441 = vpop.f32.mrf.mxu0
        %442 = vdwg.mxu0
        %v443 = vadd.f32 %v415, %v440
        %444 = vst [vmem:[%s242] sm:$0xff] %v443
        %s445 = sand.u32 %s140, 1
        %s446 = scalar_lea.sflag [#allocation4], %s445
        %s447 = sand.u32 %s140, 1
        %s448 = smul.addr %s447, 8
        %s449 = scalar_lea.vmem [#allocation5], %s448
        // Predicated region
        $region45: #{tpu_custom_call.1} parent=39 // pred_check
          %p450 = pneg %p150
        $region46: #{tpu_custom_call.1} parent=39 // pred_check_branch
          %452 = sbr.rel (%p450) target = $region48
        $region47: #{tpu_custom_call.1} parent=39 // pred_region
          %454 = vsyncadd %s446, 0
          %s455 = smul.addr %s22, 8
          %s456 = scalar_lea.hbm %s5, %s455
          %s458 = sshll.u32 %s449, 4
          %s459 = int_to_ptr.vmem [resolvable:$true] %s458
          %s460 = sshll.u32 %s456, 4
          %s461 = int_to_ptr.hbm [resolvable:$true] %s460
          %463 = dma.vmem_to_hbm [thread:$0]  %s459, 128, %s461, %s446
        $region48: #{tpu_custom_call.1} parent=39 // pred_fallthru
          _
      $region40: #{tpu_custom_call.1} parent=5 // pred_fallthru
        _
      %p464 = scmp.le.s32.totalorder 2, %s17
      // Predicated region
      $region49: #{tpu_custom_call.1} parent=5 // pred_check
        %p465 = pneg %p464
      $region50: #{tpu_custom_call.1} parent=5 // pred_check_branch
        %467 = sbr.rel (%p465) target = $region52
      $region51: #{tpu_custom_call.1} parent=5 // pred_region
        %s468 = ssub.s32 %s17, 2
        // Predicated region
        $region53: #{tpu_custom_call.1} parent=51 // pred_check
          %p469 = pneg %p156
        $region54: #{tpu_custom_call.1} parent=51 // pred_check_branch
          %471 = sbr.rel (%p469) target = $region56
        $region55: #{tpu_custom_call.1} parent=51 // pred_region
          %s472 = sand.u32 %s141, 1
          %s473 = scalar_lea.sflag [#allocation4], %s472
          %s474 = sand.u32 %s141, 1
          %s475 = smul.addr %s474, 8
          %s476 = scalar_lea.vmem [#allocation5], %s475
          %478 = dma.done %s473, 128
        $region56: #{tpu_custom_call.1} parent=51 // pred_fallthru
          _
      $region52: #{tpu_custom_call.1} parent=5 // pred_fallthru
        _
    $region6: #{tpu_custom_call.1} parent=1 // loop_footer
      %s21 = sadd.s32 1, %s17
    $region7: #{tpu_custom_call.1} parent=1 // loop_footer_branch
      %16 = sbr.rel target = $region3
    $region8: #{tpu_custom_call.1} parent=1 // loop_exit
      _
    %479 = vsyncpa [#allocation3], 1
    %s480 = scalar_lea.sflag [#allocation3], 1
    %481 = vsyncpa %s480, 1
    %482 = vsyncpa [#allocation4], 1
    %s483 = scalar_lea.sflag [#allocation4], 1
    %484 = vsyncpa %s483, 1

</llo_original>
